<compile_context>
chip_gen: v7x
topology: tpu7x:2x2x1
jax: 0.10.0
libtpu: 0.0.40
codegen_flags: <defaults>
</compile_context>

<pallas_src>
import math
import functools

import jax
import jax.numpy as jnp
from jax.experimental import pallas as pl
from jax.experimental.pallas import tpu as pltpu

LANE = 128


def _round_up(a, b):
    return ((a + b - 1) // b) * b


# ----------------------------- Pallas kernel ------------------------------ #

def ff_kernel(x_ref, w1_ref, b1_ref, w2_ref, b2_ref, gamma_ref, beta_ref,
              out_ref, acc_ref, *, eps, n_embd, e_pad):
    h_idx = pl.program_id(1)

    @pl.when(h_idx == 0)
    def _init():
        acc_ref[...] = jnp.zeros_like(acc_ref)

    x32 = x_ref[...]                                   # (TM, E_pad) f32
    xb = x32.astype(jnp.bfloat16)                      # MXU operand (bf16)

    # ff_in chunk + tanh-approx GELU (bf16 MXU operands, f32 accumulation,
    # f32 elementwise polynomial; tanh runs on the EUP).
    h = jnp.dot(xb, w1_ref[...], preferred_element_type=jnp.float32) + b1_ref[...]
    c = math.sqrt(2.0 / math.pi)
    h = 0.5 * h * (1.0 + jnp.tanh(c * (h + 0.044715 * h * h * h)))

    # TODO(synk): resid_dropout is implemented as eval-mode identity (training
    # dropout would need pltpu.prng_seed / prng_random_bits).

    # Partial ff_out projection accumulated into the f32 VMEM scratch.
    acc_ref[...] += jnp.dot(h.astype(jnp.bfloat16), w2_ref[...],
                            preferred_element_type=jnp.float32)

    @pl.when(h_idx == pl.num_programs(1) - 1)
    def _finalize():
        y = acc_ref[...] + b2_ref[...]
        res = x32 + y                                  # residual
        # LayerNorm over the real E lanes only (E may be zero-padded to E_pad):
        # torch semantics -> unbiased std (E-1), eps added to std.
        mean = jnp.sum(res, axis=-1, keepdims=True) * (1.0 / n_embd)
        diff = res - mean
        if n_embd != e_pad:
            lane = jax.lax.broadcasted_iota(jnp.int32, diff.shape, 1)
            diff_m = jnp.where(lane < n_embd, diff, 0.0)
        else:
            diff_m = diff
        var_unbiased = jnp.sum(diff_m * diff_m, axis=-1, keepdims=True) / (n_embd - 1)
        std = jnp.sqrt(var_unbiased)
        inv = pl.reciprocal(std + eps, approx=True)    # EUP reciprocal
        out_ref[...] = (gamma_ref[...] * diff * inv + beta_ref[...]).astype(out_ref.dtype)


# ------------------------------ host wrapper ------------------------------ #

def feed_forward(x, params, *, eps=1e-6, block_rows=256, block_hidden=512):
    """x: (B, S, E) f32.  params (module layout, weights pre-transposed):
    w1 (E, 4E), b1 (4E,), w2 (4E, E), b2 (E,), gamma (E,), beta (E,)."""
    B, S, E = x.shape
    H = params["w1"].shape[1]
    N = B * S

    # Lane-dense feature axes; hidden axis tiled into TH chunks.
    E_pad = _round_up(E, LANE)
    TH = _round_up(min(block_hidden, _round_up(H, LANE)), LANE)
    H_pad = _round_up(H, TH)
    n_h = H_pad // TH

    # Row tiling: bound padding waste, align to 256 (8 for tiny N).
    row_mult = 256 if N >= 256 else 8
    n_row_tiles = max(1, pl.cdiv(N, block_rows))
    TM = _round_up(pl.cdiv(N, n_row_tiles), row_mult)
    grid_rows = pl.cdiv(N, TM)
    N_pad = grid_rows * TM

    # Wrapper-side packing: flatten rows, zero-pad, weights as bf16 in HBM.
    x2 = jnp.pad(x.reshape(N, E), ((0, N_pad - N), (0, E_pad - E)))
    w1 = jnp.pad(params["w1"], ((0, E_pad - E), (0, H_pad - H))).astype(jnp.bfloat16)
    w2 = jnp.pad(params["w2"], ((0, H_pad - H), (0, E_pad - E))).astype(jnp.bfloat16)
    b1 = jnp.pad(params["b1"].reshape(1, H), ((0, 0), (0, H_pad - H)))
    b2 = jnp.pad(params["b2"].reshape(1, E), ((0, 0), (0, E_pad - E)))
    gamma = jnp.pad(params["gamma"].reshape(1, E), ((0, 0), (0, E_pad - E)))
    beta = jnp.pad(params["beta"].reshape(1, E), ((0, 0), (0, E_pad - E)))

    # Explicit scoped-VMEM budget (double-buffered tiles + scratch + headroom).
    budget = (
        2 * TM * E_pad * 4            # x tile
        + 2 * E_pad * TH * 2          # W1 chunk (bf16)
        + 2 * TH * E_pad * 2          # W2 chunk (bf16)
        + 2 * TH * 4 + 6 * E_pad * 4  # b1 / b2 / gamma / beta
        + 2 * TM * E_pad * 4          # out tile
        + TM * E_pad * 4              # f32 accumulator scratch
        + 2 * TM * TH * 4             # per-chunk hidden intermediate temporaries
    )
    vmem_limit = min(max(int(budget * 1.5) + (4 << 20), 32 << 20), 64 << 20)

    cost = pl.CostEstimate(
        flops=4 * N * E * H,
        transcendentals=N * H + N,
        bytes_accessed=(x2.size * 4 + w1.size * 2 + w2.size * 2
                        + (b1.size + b2.size + gamma.size + beta.size) * 4
                        + N_pad * E_pad * 4),
    )

    kern = functools.partial(ff_kernel, eps=eps, n_embd=E, e_pad=E_pad)

    out2 = pl.pallas_call(
        kern,
        out_shape=jax.ShapeDtypeStruct((N_pad, E_pad), x.dtype),
        grid_spec=pltpu.PrefetchScalarGridSpec(
            num_scalar_prefetch=0,
            grid=(grid_rows, n_h),                             # reduction axis last
            in_specs=[
                pl.BlockSpec((TM, E_pad), lambda i, h: (i, 0)),    # x rows
                pl.BlockSpec((E_pad, TH), lambda i, h: (0, h)),    # W1 chunk
                pl.BlockSpec((1, TH),     lambda i, h: (0, h)),    # b1 chunk
                pl.BlockSpec((TH, E_pad), lambda i, h: (h, 0)),    # W2 chunk
                pl.BlockSpec((1, E_pad),  lambda i, h: (0, 0)),    # b2
                pl.BlockSpec((1, E_pad),  lambda i, h: (0, 0)),    # gamma
                pl.BlockSpec((1, E_pad),  lambda i, h: (0, 0)),    # beta
            ],
            out_specs=pl.BlockSpec((TM, E_pad), lambda i, h: (i, 0)),
            scratch_shapes=[pltpu.VMEM((TM, E_pad), jnp.float32)],
        ),
        compiler_params=pltpu.CompilerParams(
            dimension_semantics=("parallel", "arbitrary"),
            vmem_limit_bytes=vmem_limit),
        cost_estimate=cost,
    )(x2, w1, b1, w2, b2, gamma, beta)

    return out2[:N, :E].reshape(B, S, E)


# -------------------------- plain-JAX references --------------------------- #

def reference(x, params, *, eps=1e-6):
    """Exact f32 module semantics."""
    E = x.shape[-1]
    h = x @ params["w1"] + params["b1"]
    h = 0.5 * h * (1.0 + jnp.tanh(math.sqrt(2.0 / math.pi)
                                  * (h + 0.044715 * h ** 3)))
    y = h @ params["w2"] + params["b2"]
    res = x + y
    mean = res.mean(-1, keepdims=True)
    std = jnp.sqrt(((res - mean) ** 2).sum(-1, keepdims=True) / (E - 1))
    return params["gamma"] * (res - mean) / (std + eps) + params["beta"]


def reference_bf16(x, params, *, eps=1e-6):
    """Reference matching the kernel's bf16-operand / f32-accumulate matmuls."""
    E = x.shape[-1]
    w1 = params["w1"].astype(jnp.bfloat16)
    w2 = params["w2"].astype(jnp.bfloat16)
    h = jnp.dot(x.astype(jnp.bfloat16), w1,
                preferred_element_type=jnp.float32) + params["b1"]
    h = 0.5 * h * (1.0 + jnp.tanh(math.sqrt(2.0 / math.pi)
                                  * (h + 0.044715 * h ** 3)))
    y = jnp.dot(h.astype(jnp.bfloat16), w2,
                preferred_element_type=jnp.float32) + params["b2"]
    res = x + y
    mean = res.mean(-1, keepdims=True)
    std = jnp.sqrt(((res - mean) ** 2).sum(-1, keepdims=True) / (E - 1))
    return params["gamma"] * (res - mean) / (std + eps) + params["beta"]


# --------------------------------- main ------------------------------------ #

if __name__ == "__main__":
    # config: n_embd=32 -> hidden=128; batch=2, seq=8; resid_pdrop handled as
    # eval-mode identity.
    B, S, E = 2, 8, 32
    H = 4 * E

    key0 = jax.random.PRNGKey(0)
    keys = jax.random.split(key0, 6)

    def linear_init(kw, kb, fan_in, shape_w, shape_b):
        bound = 1.0 / math.sqrt(fan_in)
        w = jax.random.uniform(kw, shape_w, jnp.float32, -bound, bound)
        b = jax.random.uniform(kb, shape_b, jnp.float32, -bound, bound)
        return w, b

    w1, b1 = linear_init(keys[0], keys[1], E, (E, H), (H,))
    w2, b2 = linear_init(keys[2], keys[3], H, (H, E), (E,))

    params = dict(
        w1=w1, b1=b1, w2=w2, b2=b2,
        gamma=jnp.ones((E,), jnp.float32),
        beta=jnp.zeros((E,), jnp.float32),
    )

    x = jax.random.normal(keys[4], (B, S, E), jnp.float32)

    out = jax.block_until_ready(feed_forward(x, params))
    assert out.shape == (B, S, E)

    ref_match = reference_bf16(x, params)   # same matmul numerics as kernel
    ref_exact = reference(x, params)        # exact module semantics
    assert jnp.allclose(out, ref_match, atol=1e-2, rtol=1e-2), \
        "mismatch vs bf16-matched reference"
    assert jnp.allclose(out, ref_exact, atol=5e-2, rtol=5e-2), \
        "mismatch vs exact f32 reference"

    print("KERNEL_OK")
</pallas_src>

<mosaic_0001>
module attributes {stable_mosaic.version = 11 : i64} {
  func.func @ff_kernel(%arg0: i32, %arg1: i32, %arg2: memref<16x128xf32, #tpu.memory_space<vmem>>, %arg3: memref<128x128xbf16, #tpu.memory_space<vmem>>, %arg4: memref<1x128xf32, #tpu.memory_space<vmem>>, %arg5: memref<128x128xbf16, #tpu.memory_space<vmem>>, %arg6: memref<1x128xf32, #tpu.memory_space<vmem>>, %arg7: memref<1x128xf32, #tpu.memory_space<vmem>>, %arg8: memref<1x128xf32, #tpu.memory_space<vmem>>, %arg9: memref<16x128xf32, #tpu.memory_space<vmem>>, %arg10: memref<16x128xf32, #tpu.memory_space<vmem>>) attributes {dimension_semantics = [#tpu.dimension_semantics<parallel>, #tpu.dimension_semantics<arbitrary>], iteration_bounds = array<i64: 1, 1>, scalar_prefetch = 0 : i64, scratch_operands = 1 : i64, tpu.core_type = #tpu.core_type<tc>, window_params = [{transform_indices = @transform_0, window_bounds = array<i64: 16, 128>}, {transform_indices = @transform_1, window_bounds = array<i64: 128, 128>}, {transform_indices = @transform_2, window_bounds = array<i64: 1, 128>}, {transform_indices = @transform_3, window_bounds = array<i64: 128, 128>}, {pipeline_mode = #tpu.pipeline_mode<synchronous>, transform_indices = @transform_4, window_bounds = array<i64: 1, 128>}, {pipeline_mode = #tpu.pipeline_mode<synchronous>, transform_indices = @transform_5, window_bounds = array<i64: 1, 128>}, {pipeline_mode = #tpu.pipeline_mode<synchronous>, transform_indices = @transform_6, window_bounds = array<i64: 1, 128>}, {transform_indices = @transform_7, window_bounds = array<i64: 16, 128>}]} {
    %c0_i32 = arith.constant 0 : i32
    %0 = arith.cmpi eq, %arg1, %c0_i32 : i32
    %1 = arith.extui %0 : i1 to i32
    %c0_i32_0 = arith.constant 0 : i32
    %2 = arith.cmpi ne, %1, %c0_i32_0 : i32
    scf.if %2 {
      %cst_19 = arith.constant 0.000000e+00 : f32
      %32 = vector.broadcast %cst_19 : f32 to vector<16x128xf32>
      %c0_20 = arith.constant 0 : index
      %c0_21 = arith.constant 0 : index
      %33 = vector.load %arg10[%c0_20, %c0_21] : memref<16x128xf32, #tpu.memory_space<vmem>>, vector<16x128xf32>
      tpu.vector_store %arg10[%c0_20, %c0_21], %32 {strides = array<i32>} : memref<16x128xf32, #tpu.memory_space<vmem>>, vector<16x128xf32>,
    } else {
    }
    %c0 = arith.constant 0 : index
    %c0_1 = arith.constant 0 : index
    %3 = vector.load %arg2[%c0, %c0_1] : memref<16x128xf32, #tpu.memory_space<vmem>>, vector<16x128xf32>
    %4 = arith.truncf %3 : vector<16x128xf32> to vector<16x128xbf16>
    %c0_2 = arith.constant 0 : index
    %c0_3 = arith.constant 0 : index
    %5 = vector.load %arg3[%c0_2, %c0_3] : memref<128x128xbf16, #tpu.memory_space<vmem>>, vector<128x128xbf16>
    %cst = arith.constant dense<0.000000e+00> : vector<16x128xf32>
    %6 = tpu.matmul %4, %5, %cst {dimension_numbers = #tpu.dot_dimension_numbers<[1], [0], [0], [1], [0, 0, 1, 1], [], []>} : vector<16x128xbf16>, vector<128x128xbf16>, vector<16x128xf32> -> vector<16x128xf32>
    %c0_4 = arith.constant 0 : index
    %c0_5 = arith.constant 0 : index
    %7 = vector.load %arg4[%c0_4, %c0_5] : memref<1x128xf32, #tpu.memory_space<vmem>>, vector<1x128xf32>
    %8 = vector.broadcast %7 : vector<1x128xf32> to vector<16x128xf32>
    %9 = arith.addf %6, %8 : vector<16x128xf32>
    %cst_6 = arith.constant 5.000000e-01 : f32
    %10 = vector.broadcast %cst_6 : f32 to vector<16x128xf32>
    %11 = arith.mulf %10, %9 : vector<16x128xf32>
    %cst_7 = arith.constant 4.471500e-02 : f32
    %12 = vector.broadcast %cst_7 : f32 to vector<16x128xf32>
    %13 = arith.mulf %12, %9 : vector<16x128xf32>
    %14 = arith.mulf %13, %9 : vector<16x128xf32>
    %15 = arith.mulf %14, %9 : vector<16x128xf32>
    %16 = arith.addf %9, %15 : vector<16x128xf32>
    %cst_8 = arith.constant 0.797884583 : f32
    %17 = vector.broadcast %cst_8 : f32 to vector<16x128xf32>
    %18 = arith.mulf %17, %16 : vector<16x128xf32>
    %19 = math.tanh %18 : vector<16x128xf32>
    %cst_9 = arith.constant 1.000000e+00 : f32
    %20 = vector.broadcast %cst_9 : f32 to vector<16x128xf32>
    %21 = arith.addf %20, %19 : vector<16x128xf32>
    %22 = arith.mulf %11, %21 : vector<16x128xf32>
    %c0_10 = arith.constant 0 : index
    %c0_11 = arith.constant 0 : index
    %23 = vector.load %arg10[%c0_10, %c0_11] : memref<16x128xf32, #tpu.memory_space<vmem>>, vector<16x128xf32>
    %24 = arith.truncf %22 : vector<16x128xf32> to vector<16x128xbf16>
    %c0_12 = arith.constant 0 : index
    %c0_13 = arith.constant 0 : index
    %25 = vector.load %arg5[%c0_12, %c0_13] : memref<128x128xbf16, #tpu.memory_space<vmem>>, vector<128x128xbf16>
    %cst_14 = arith.constant dense<0.000000e+00> : vector<16x128xf32>
    %26 = tpu.matmul %24, %25, %cst_14 {dimension_numbers = #tpu.dot_dimension_numbers<[1], [0], [0], [1], [0, 0, 1, 1], [], []>} : vector<16x128xbf16>, vector<128x128xbf16>, vector<16x128xf32> -> vector<16x128xf32>
    %27 = arith.addf %23, %26 : vector<16x128xf32>
    %c0_15 = arith.constant 0 : index
    %c0_16 = arith.constant 0 : index
    %28 = vector.load %arg10[%c0_15, %c0_16] : memref<16x128xf32, #tpu.memory_space<vmem>>, vector<16x128xf32>
    tpu.vector_store %arg10[%c0_15, %c0_16], %27 {strides = array<i32>} : memref<16x128xf32, #tpu.memory_space<vmem>>, vector<16x128xf32>,
    %c0_i32_17 = arith.constant 0 : i32
    %29 = arith.cmpi eq, %arg1, %c0_i32_17 : i32
    %30 = arith.extui %29 : i1 to i32
    %c0_i32_18 = arith.constant 0 : i32
    %31 = arith.cmpi ne, %30, %c0_i32_18 : i32
    scf.if %31 {
      %c0_19 = arith.constant 0 : index
      %c0_20 = arith.constant 0 : index
      %32 = vector.load %arg10[%c0_19, %c0_20] : memref<16x128xf32, #tpu.memory_space<vmem>>, vector<16x128xf32>
      %c0_21 = arith.constant 0 : index
      %c0_22 = arith.constant 0 : index
      %33 = vector.load %arg6[%c0_21, %c0_22] : memref<1x128xf32, #tpu.memory_space<vmem>>, vector<1x128xf32>
      %34 = vector.broadcast %33 : vector<1x128xf32> to vector<16x128xf32>
      %35 = arith.addf %32, %34 : vector<16x128xf32>
      %36 = arith.addf %3, %35 : vector<16x128xf32>
      %cst_23 = arith.constant dense<0.000000e+00> : vector<16xf32>
      %37 = vector.multi_reduction <add>, %36, %cst_23 [1] : vector<16x128xf32> to vector<16xf32>
      %38 = vector.shape_cast %37 : vector<16xf32> to vector<16x1xf32>
      %cst_24 = arith.constant 3.125000e-02 : f32
      %39 = vector.broadcast %cst_24 : f32 to vector<16x1xf32>
      %40 = arith.mulf %38, %39 : vector<16x1xf32>
      %41 = vector.broadcast %40 : vector<16x1xf32> to vector<16x128xf32>
      %42 = arith.subf %36, %41 : vector<16x128xf32>
      %43 = tpu.iota {dimensions = array<i32: 1>} : vector<16x128xi32>
      %c32_i32 = arith.constant 32 : i32
      %44 = vector.broadcast %c32_i32 : i32 to vector<16x128xi32>
      %45 = arith.cmpi slt, %43, %44 : vector<16x128xi32>
      %cst_25 = arith.constant 0.000000e+00 : f32
      %46 = vector.broadcast %cst_25 : f32 to vector<16x128xf32>
      %47 = arith.select %45, %42, %46 : vector<16x128xi1>, vector<16x128xf32>
      %48 = arith.mulf %47, %47 : vector<16x128xf32>
      %cst_26 = arith.constant dense<0.000000e+00> : vector<16xf32>
      %49 = vector.multi_reduction <add>, %48, %cst_26 [1] : vector<16x128xf32> to vector<16xf32>
      %50 = vector.shape_cast %49 : vector<16xf32> to vector<16x1xf32>
      %cst_27 = arith.constant 3.100000e+01 : f32
      %51 = vector.broadcast %cst_27 : f32 to vector<16x1xf32>
      %52 = arith.divf %50, %51 : vector<16x1xf32>
      %53 = math.sqrt %52 : vector<16x1xf32>
      %cst_28 = arith.constant 9.99999997E-7 : f32
      %54 = vector.broadcast %cst_28 : f32 to vector<16x1xf32>
      %55 = arith.addf %53, %54 : vector<16x1xf32>
      %56 = tpu.reciprocal %55 {approx = true} : vector<16x1xf32> -> vector<16x1xf32>
      %c0_29 = arith.constant 0 : index
      %c0_30 = arith.constant 0 : index
      %57 = vector.load %arg7[%c0_29, %c0_30] : memref<1x128xf32, #tpu.memory_space<vmem>>, vector<1x128xf32>
      %58 = vector.broadcast %57 : vector<1x128xf32> to vector<16x128xf32>
      %59 = arith.mulf %58, %42 : vector<16x128xf32>
      %60 = vector.broadcast %56 : vector<16x1xf32> to vector<16x128xf32>
      %61 = arith.mulf %59, %60 : vector<16x128xf32>
      %c0_31 = arith.constant 0 : index
      %c0_32 = arith.constant 0 : index
      %62 = vector.load %arg8[%c0_31, %c0_32] : memref<1x128xf32, #tpu.memory_space<vmem>>, vector<1x128xf32>
      %63 = vector.broadcast %62 : vector<1x128xf32> to vector<16x128xf32>
      %64 = arith.addf %61, %63 : vector<16x128xf32>
      %c0_33 = arith.constant 0 : index
      %c0_34 = arith.constant 0 : index
      %65 = vector.load %arg9[%c0_33, %c0_34] : memref<16x128xf32, #tpu.memory_space<vmem>>, vector<16x128xf32>
      tpu.vector_store %arg9[%c0_33, %c0_34], %64 {strides = array<i32>} : memref<16x128xf32, #tpu.memory_space<vmem>>, vector<16x128xf32>,
    } else {
    }
    return
  }
  func.func @transform_0(%arg0: i32, %arg1: i32) -> (i32, i32) {
    %c0_i32 = arith.constant 0 : i32
    %c0_i32_0 = arith.constant 0 : i32
    return %arg0, %c0_i32 : i32, i32
  }
  func.func @transform_1(%arg0: i32, %arg1: i32) -> (i32, i32) {
    %c0_i32 = arith.constant 0 : i32
    %c0_i32_0 = arith.constant 0 : i32
    return %c0_i32, %arg1 : i32, i32
  }
  func.func @transform_2(%arg0: i32, %arg1: i32) -> (i32, i32) {
    %c0_i32 = arith.constant 0 : i32
    %c0_i32_0 = arith.constant 0 : i32
    return %c0_i32, %arg1 : i32, i32
  }
  func.func @transform_3(%arg0: i32, %arg1: i32) -> (i32, i32) {
    %c0_i32 = arith.constant 0 : i32
    %c0_i32_0 = arith.constant 0 : i32
    return %arg1, %c0_i32 : i32, i32
  }
  func.func @transform_4(%arg0: i32, %arg1: i32) -> (i32, i32) {
    %c0_i32 = arith.constant 0 : i32
    %c0_i32_0 = arith.constant 0 : i32
    %c0_i32_1 = arith.constant 0 : i32
    return %c0_i32, %c0_i32_0 : i32, i32
  }
  func.func @transform_5(%arg0: i32, %arg1: i32) -> (i32, i32) {
    %c0_i32 = arith.constant 0 : i32
    %c0_i32_0 = arith.constant 0 : i32
    %c0_i32_1 = arith.constant 0 : i32
    return %c0_i32, %c0_i32_0 : i32, i32
  }
  func.func @transform_6(%arg0: i32, %arg1: i32) -> (i32, i32) {
    %c0_i32 = arith.constant 0 : i32
    %c0_i32_0 = arith.constant 0 : i32
    %c0_i32_1 = arith.constant 0 : i32
    return %c0_i32, %c0_i32_0 : i32, i32
  }
  func.func @transform_7(%arg0: i32, %arg1: i32) -> (i32, i32) {
    %c0_i32 = arith.constant 0 : i32
    %c0_i32_0 = arith.constant 0 : i32
    return %arg0, %c0_i32 : i32, i32
  }
}

</mosaic_0001>

<llo_original>
// kernel: tpu_custom_call.1
$region0: #{tpu_custom_call.1}
  #allocation0 [shape = 'u32[]', space=smem, size = 0x4, offset = 0x4, fixed_abs, tag = 'smem constant byte address 0x4 - core index']
  #allocation1 [shape = 'u32[144,128]{1,0:T(1,128)}', space=vmem, size = 0x12000, scoped, tag = 'internal scratch']
  #allocation2 [shape = 'f32[16,128]{1,0:T(8,128)}', space=vmem, size = 0x2000, scoped, tag = 'scratch operand']
  %s0 = inlined_call_operand.hbm [shape: f32[16,128], index: 0, kind: input, shape index: {}]
  %s1 = inlined_call_operand.hbm [shape: bf16[128,128], index: 1, kind: input, shape index: {}]
  %s2 = inlined_call_operand.vmem [shape: f32[1,128], index: 2, kind: input, shape index: {}]
  %s3 = inlined_call_operand.hbm [shape: bf16[128,128], index: 3, kind: input, shape index: {}]
  %s4 = inlined_call_operand.vmem [shape: f32[1,128], index: 4, kind: input, shape index: {}]
  %s5 = inlined_call_operand.vmem [shape: f32[1,128], index: 5, kind: input, shape index: {}]
  %s6 = inlined_call_operand.vmem [shape: f32[1,128], index: 6, kind: input, shape index: {}]
  %s7 = inlined_call_operand.hbm [shape: f32[16,128], index: 7, kind: output, shape index: {}]
  %s8 = sld [smem:[#allocation0]]
  $region58: #{tpu_custom_call.1} parent=0
    _
  %s10 = ssub.s32 1, %s8
  %s11 = scalar_select 0, %s10, %s8
  $region1: #{tpu_custom_call.1} parent=0
    #allocation3 [shape = 'u8[8192]{0}', space=vmem, size = 0x2000, scoped, tag = 'input window, operand 0, single buffered']
    #allocation4 [shape = 's32[1]{0}', space=sflag, size = 0x4, scoped, tag = 'scoped memory for tpu_custom_call.1']
    #allocation5 [shape = 's32[1]{0}', space=sflag, size = 0x4, scoped, tag = 'scoped memory for tpu_custom_call.1']
    #allocation6 [shape = 'u8[32768]{0}', space=vmem, size = 0x8000, scoped, tag = 'input window, operand 1, single buffered']
    #allocation7 [shape = 's32[1]{0}', space=sflag, size = 0x4, scoped, tag = 'scoped memory for tpu_custom_call.1']
    #allocation8 [shape = 'u8[32768]{0}', space=vmem, size = 0x8000, scoped, tag = 'input window, operand 3, single buffered']
    #allocation9 [shape = 'u8[8192]{0}', space=vmem, size = 0x2000, scoped, tag = 'output window, operand 0, single buffered']
    %12 = vsyncpa [#allocation4], 0
    %13 = vsyncpa [#allocation7], 0
    %14 = vsyncpa [#allocation5], 0
    // Predicated region
    $region2: #{tpu_custom_call.1} parent=1 // pred_check
      _
    $region3: #{tpu_custom_call.1} parent=1 // pred_check_branch
      %16 = sbr.rel (0) target = $region5
    $region4: #{tpu_custom_call.1} parent=1 // pred_region
      %s18 = ssub.s32 256, 256
      %19 = vsyncadd [#allocation4], %s18
      %s20 = sshll.u32 [#allocation3], 4
      %s21 = int_to_ptr.vmem [resolvable:$true] %s20
      %26 = dma.hbm_to_vmem [thread:$0]  %s0, 256, %s21, [#allocation4], 128, 128, 8
    $region5: #{tpu_custom_call.1} parent=1 // pred_fallthru
      _
    // Predicated region
    $region6: #{tpu_custom_call.1} parent=1 // pred_check
      _
    $region7: #{tpu_custom_call.1} parent=1 // pred_check_branch
      %28 = sbr.rel (0) target = $region9
    $region8: #{tpu_custom_call.1} parent=1 // pred_region
      %s30 = ssub.s32 1024, 1024
      %31 = vsyncadd [#allocation7], %s30
      %s32 = sshll.u32 [#allocation6], 4
      %s33 = int_to_ptr.vmem [resolvable:$true] %s32
      %38 = dma.hbm_to_vmem [thread:$0]  %s1, 1024, %s33, [#allocation7], 64, 64, 4
    $region9: #{tpu_custom_call.1} parent=1 // pred_fallthru
      _
    // Predicated region
    $region10: #{tpu_custom_call.1} parent=1 // pred_check
      _
    $region11: #{tpu_custom_call.1} parent=1 // pred_check_branch
      %40 = sbr.rel (0) target = $region13
    $region12: #{tpu_custom_call.1} parent=1 // pred_region
      _
    $region13: #{tpu_custom_call.1} parent=1 // pred_fallthru
      _
    // Predicated region
    $region14: #{tpu_custom_call.1} parent=1 // pred_check
      _
    $region15: #{tpu_custom_call.1} parent=1 // pred_check_branch
      %42 = sbr.rel (0) target = $region17
    $region16: #{tpu_custom_call.1} parent=1 // pred_region
      %s44 = ssub.s32 1024, 1024
      %45 = vsyncadd [#allocation7], %s44
      %s46 = sshll.u32 [#allocation8], 4
      %s47 = int_to_ptr.vmem [resolvable:$true] %s46
      %52 = dma.hbm_to_vmem [thread:$0]  %s3, 1024, %s47, [#allocation7], 64, 64, 4
    $region17: #{tpu_custom_call.1} parent=1 // pred_fallthru
      _
    // Predicated region
    $region18: #{tpu_custom_call.1} parent=1 // pred_check
      _
    $region19: #{tpu_custom_call.1} parent=1 // pred_check_branch
      %54 = sbr.rel (0) target = $region21
    $region20: #{tpu_custom_call.1} parent=1 // pred_region
      _
    $region21: #{tpu_custom_call.1} parent=1 // pred_fallthru
      _
    // Predicated region
    $region22: #{tpu_custom_call.1} parent=1 // pred_check
      _
    $region23: #{tpu_custom_call.1} parent=1 // pred_check_branch
      %56 = sbr.rel (0) target = $region25
    $region24: #{tpu_custom_call.1} parent=1 // pred_region
      _
    $region25: #{tpu_custom_call.1} parent=1 // pred_fallthru
      _
    // Predicated region
    $region26: #{tpu_custom_call.1} parent=1 // pred_check
      _
    $region27: #{tpu_custom_call.1} parent=1 // pred_check_branch
      %58 = sbr.rel (0) target = $region29
    $region28: #{tpu_custom_call.1} parent=1 // pred_region
      _
    $region29: #{tpu_custom_call.1} parent=1 // pred_fallthru
      _
    // Predicated region
    $region30: #{tpu_custom_call.1} parent=1 // pred_check
      _
    $region31: #{tpu_custom_call.1} parent=1 // pred_check_branch
      %60 = sbr.rel (0) target = $region33
    $region32: #{tpu_custom_call.1} parent=1 // pred_region
      %61 = dma.done [#allocation4], 256
    $region33: #{tpu_custom_call.1} parent=1 // pred_fallthru
      _
    // Predicated region
    $region34: #{tpu_custom_call.1} parent=1 // pred_check
      _
    $region35: #{tpu_custom_call.1} parent=1 // pred_check_branch
      %63 = sbr.rel (0) target = $region37
    $region36: #{tpu_custom_call.1} parent=1 // pred_region
      %64 = dma.done [#allocation7], 1024
    $region37: #{tpu_custom_call.1} parent=1 // pred_fallthru
      _
    // Predicated region
    $region38: #{tpu_custom_call.1} parent=1 // pred_check
      _
    $region39: #{tpu_custom_call.1} parent=1 // pred_check_branch
      %66 = sbr.rel (0) target = $region41
    $region40: #{tpu_custom_call.1} parent=1 // pred_region
      %67 = dma.done [#allocation7], 1024
    $region41: #{tpu_custom_call.1} parent=1 // pred_fallthru
      _
    %p69 = scmp.eq.s32.totalorder 0, 0
    // Predicated region
    $region42: #{tpu_custom_call.1} parent=1 // pred_check
      %p70 = pneg %p69
    $region43: #{tpu_custom_call.1} parent=1 // pred_check_branch
      %72 = sbr.rel (%p70) target = $region45
    $region44: #{tpu_custom_call.1} parent=1 // pred_region
      %73 = vst [vmem:[#allocation2] sm:$0xff] 0.0
      %74 = vst [vmem:[#allocation2 + $0x8] sm:$0xff] 0.0
    $region45: #{tpu_custom_call.1} parent=1 // pred_fallthru
      _
    %v75 = vld [vmem:[#allocation3] sm:$0xff]
    %v76 = vld [vmem:[#allocation3 + $0x8] sm:$0xff]
    %v77 = vpack.c.bf16 %v76, %v75
    %v78 = vld [vmem:[#allocation6] sm:$0xf]
    %v79 = vld [vmem:[#allocation6 + $0x4] sm:$0xf]
    %v80 = vld [vmem:[#allocation6 + $0x8] sm:$0xf]
    %v81 = vld [vmem:[#allocation6 + $0xc] sm:$0xf]
    %v82 = vld [vmem:[#allocation6 + $0x10] sm:$0xf]
    %v83 = vld [vmem:[#allocation6 + $0x14] sm:$0xf]
    %v84 = vld [vmem:[#allocation6 + $0x18] sm:$0xf]
    %v85 = vld [vmem:[#allocation6 + $0x1c] sm:$0xf]
    %v86 = vld [vmem:[#allocation6 + $0x20] sm:$0xf]
    %v87 = vld [vmem:[#allocation6 + $0x24] sm:$0xf]
    %v88 = vld [vmem:[#allocation6 + $0x28] sm:$0xf]
    %v89 = vld [vmem:[#allocation6 + $0x2c] sm:$0xf]
    %v90 = vld [vmem:[#allocation6 + $0x30] sm:$0xf]
    %v91 = vld [vmem:[#allocation6 + $0x34] sm:$0xf]
    %v92 = vld [vmem:[#allocation6 + $0x38] sm:$0xf]
    %v93 = vld [vmem:[#allocation6 + $0x3c] sm:$0xf]
    %v94 = vld [vmem:[%s2] sm:$0x1]
    %v96 = vlaneseq
    %v97 = vshrl.u32 %v96, 7
    %v98 = vsub.s32 0, %v97
    %v99 = vrot.slane %v94, %v98
    %v117 = vunpack.c.l.b16 %v78
    %v118 = vunpack.c.l.b16 %v79
    %v119 = vunpack.c.l.b16 %v80
    %v120 = vunpack.c.l.b16 %v81
    %v121 = vunpack.c.l.b16 %v82
    %v122 = vunpack.c.l.b16 %v83
    %v123 = vunpack.c.l.b16 %v84
    %v124 = vunpack.c.l.b16 %v85
    %v125 = vunpack.c.l.b16 %v86
    %v126 = vunpack.c.l.b16 %v87
    %v127 = vunpack.c.l.b16 %v88
    %v128 = vunpack.c.l.b16 %v89
    %v129 = vunpack.c.l.b16 %v90
    %v130 = vunpack.c.l.b16 %v91
    %v131 = vunpack.c.l.b16 %v92
    %v132 = vunpack.c.l.b16 %v93
    %v133 = vpack.c.b16 %v118, %v117
    %v134 = vpack.c.b16 %v120, %v119
    %v135 = vpack.c.b16 %v122, %v121
    %v136 = vpack.c.b16 %v124, %v123
    %v137 = vpack.c.b16 %v126, %v125
    %v138 = vpack.c.b16 %v128, %v127
    %v139 = vpack.c.b16 %v130, %v129
    %v140 = vpack.c.b16 %v132, %v131
    %149 = vmatprep.subr.bf16.mxu0 0
    %150 = vmatpush1.bf16.msra.mxu0 %v133
    %151 = vmatprep.subr.bf16.mxu0 0
    %152 = vmatpush1.bf16.msra.mxu0 %v134
    %153 = vmatprep.subr.bf16.mxu0 0
    %154 = vmatpush1.bf16.msra.mxu0 %v135
    %155 = vmatprep.subr.bf16.mxu0 0
    %156 = vmatpush1.bf16.msra.mxu0 %v136
    %157 = vmatprep.subr.bf16.mxu0 0
    %158 = vmatpush1.bf16.msra.mxu0 %v137
    %159 = vmatprep.subr.bf16.mxu0 0
    %160 = vmatpush1.bf16.msra.mxu0 %v138
    %161 = vmatprep.subr.bf16.mxu0 0
    %162 = vmatpush1.bf16.msra.mxu0 %v139
    %163 = vmatprep.subr.bf16.mxu0 0
    %164 = vmatpush1.bf16.msra.mxu0 %v140
    %165 = vmatprep.subr.bf16.mxu0 0
    %166 = vmatpush1.bf16.msra.mxu0 0
    %167 = vmatprep.subr.bf16.mxu0 0
    %168 = vmatpush1.bf16.msra.mxu0 0
    %169 = vmatprep.subr.bf16.mxu0 0
    %170 = vmatpush1.bf16.msra.mxu0 0
    %171 = vmatprep.subr.bf16.mxu0 0
    %172 = vmatpush1.bf16.msra.mxu0 0
    %173 = vmatprep.subr.bf16.mxu0 0
    %174 = vmatpush1.bf16.msra.mxu0 0
    %175 = vmatprep.subr.bf16.mxu0 0
    %176 = vmatpush1.bf16.msra.mxu0 0
    %177 = vmatprep.subr.bf16.mxu0 0
    %178 = vmatpush1.bf16.msra.mxu0 0
    %179 = vmatprep.subr.bf16.mxu0 0
    %180 = vmatpush1.bf16.msra.mxu0 0
    %181 = vmatprep.mubr.bf16.mxu0 0
    %182 = vmatmul.mubr.bf16.gmra.mrb[0].mxu0 %v77
    %v183 = vpop.f32.mrb[0].mxu0
    %v184 = vadd.f32 %v99, %v183
    %v185 = vpop.f32.mrb[0].mxu0
    %v186 = vpop.f32.mrb[0].mxu0
    %v187 = vadd.f32 %v99, %v186
    %v188 = vpop.f32.mrb[0].mxu0
    %189 = vdwg.mxu0
    %v190 = vmul.f32 %v184, 0.5
    %v191 = vmul.f32 %v187, 0.5
    %v192 = vmul.f32 %v184, 0.044715
    %v193 = vmul.f32 %v187, 0.044715
    %v194 = vmul.f32 %v192, %v184
    %v195 = vmul.f32 %v193, %v187
    %v196 = vmul.f32 %v194, %v184
    %v197 = vmul.f32 %v195, %v187
    %v198 = vadd.f32 %v184, %v196
    %v199 = vadd.f32 %v187, %v197
    %v200 = vmul.f32 %v198, 0.7978846
    %v201 = vmul.f32 %v199, 0.7978846
    %v202 = vtanh.pop %v200
    %v203 = vtanh.pop %v201
    %v204 = vadd.f32 %v202, 1.0
    %v205 = vadd.f32 %v203, 1.0
    %v206 = vmul.f32 %v190, %v204
    %v207 = vmul.f32 %v191, %v205
    %v208 = vld [vmem:[#allocation2] sm:$0xff]
    %v209 = vld [vmem:[#allocation2 + $0x8] sm:$0xff]
    %v210 = vpack.c.bf16 %v207, %v206
    %v211 = vld [vmem:[#allocation8] sm:$0xf]
    %v212 = vld [vmem:[#allocation8 + $0x4] sm:$0xf]
    %v213 = vld [vmem:[#allocation8 + $0x8] sm:$0xf]
    %v214 = vld [vmem:[#allocation8 + $0xc] sm:$0xf]
    %v215 = vld [vmem:[#allocation8 + $0x10] sm:$0xf]
    %v216 = vld [vmem:[#allocation8 + $0x14] sm:$0xf]
    %v217 = vld [vmem:[#allocation8 + $0x18] sm:$0xf]
    %v218 = vld [vmem:[#allocation8 + $0x1c] sm:$0xf]
    %v219 = vld [vmem:[#allocation8 + $0x20] sm:$0xf]
    %v220 = vld [vmem:[#allocation8 + $0x24] sm:$0xf]
    %v221 = vld [vmem:[#allocation8 + $0x28] sm:$0xf]
    %v222 = vld [vmem:[#allocation8 + $0x2c] sm:$0xf]
    %v223 = vld [vmem:[#allocation8 + $0x30] sm:$0xf]
    %v224 = vld [vmem:[#allocation8 + $0x34] sm:$0xf]
    %v225 = vld [vmem:[#allocation8 + $0x38] sm:$0xf]
    %v226 = vld [vmem:[#allocation8 + $0x3c] sm:$0xf]
    %v243 = vunpack.c.l.b16 %v211
    %v244 = vunpack.c.l.b16 %v212
    %v245 = vunpack.c.l.b16 %v213
    %v246 = vunpack.c.l.b16 %v214
    %v247 = vunpack.c.l.b16 %v215
    %v248 = vunpack.c.l.b16 %v216
    %v249 = vunpack.c.l.b16 %v217
    %v250 = vunpack.c.l.b16 %v218
    %v251 = vunpack.c.l.b16 %v219
    %v252 = vunpack.c.l.b16 %v220
    %v253 = vunpack.c.l.b16 %v221
    %v254 = vunpack.c.l.b16 %v222
    %v255 = vunpack.c.l.b16 %v223
    %v256 = vunpack.c.l.b16 %v224
    %v257 = vunpack.c.l.b16 %v225
    %v258 = vunpack.c.l.b16 %v226
    %v259 = vpack.c.b16 %v244, %v243
    %v260 = vpack.c.b16 %v246, %v245
    %v261 = vpack.c.b16 %v248, %v247
    %v262 = vpack.c.b16 %v250, %v249
    %v263 = vpack.c.b16 %v252, %v251
    %v264 = vpack.c.b16 %v254, %v253
    %v265 = vpack.c.b16 %v256, %v255
    %v266 = vpack.c.b16 %v258, %v257
    %275 = vmatprep.subr.bf16.mxu0 0
    %276 = vmatpush1.bf16.msra.mxu0 %v259
    %277 = vmatprep.subr.bf16.mxu0 0
    %278 = vmatpush1.bf16.msra.mxu0 %v260
    %279 = vmatprep.subr.bf16.mxu0 0
    %280 = vmatpush1.bf16.msra.mxu0 %v261
    %281 = vmatprep.subr.bf16.mxu0 0
    %282 = vmatpush1.bf16.msra.mxu0 %v262
    %283 = vmatprep.subr.bf16.mxu0 0
    %284 = vmatpush1.bf16.msra.mxu0 %v263
    %285 = vmatprep.subr.bf16.mxu0 0
    %286 = vmatpush1.bf16.msra.mxu0 %v264
    %287 = vmatprep.subr.bf16.mxu0 0
    %288 = vmatpush1.bf16.msra.mxu0 %v265
    %289 = vmatprep.subr.bf16.mxu0 0
    %290 = vmatpush1.bf16.msra.mxu0 %v266
    %291 = vmatprep.subr.bf16.mxu0 0
    %292 = vmatpush1.bf16.msra.mxu0 0
    %293 = vmatprep.subr.bf16.mxu0 0
    %294 = vmatpush1.bf16.msra.mxu0 0
    %295 = vmatprep.subr.bf16.mxu0 0
    %296 = vmatpush1.bf16.msra.mxu0 0
    %297 = vmatprep.subr.bf16.mxu0 0
    %298 = vmatpush1.bf16.msra.mxu0 0
    %299 = vmatprep.subr.bf16.mxu0 0
    %300 = vmatpush1.bf16.msra.mxu0 0
    %301 = vmatprep.subr.bf16.mxu0 0
    %302 = vmatpush1.bf16.msra.mxu0 0
    %303 = vmatprep.subr.bf16.mxu0 0
    %304 = vmatpush1.bf16.msra.mxu0 0
    %305 = vmatprep.subr.bf16.mxu0 0
    %306 = vmatpush1.bf16.msra.mxu0 0
    %307 = vmatprep.mubr.bf16.mxu0 0
    %308 = vmatmul.mubr.bf16.gmra.mrb[0].mxu0 %v210
    %v309 = vpop.f32.mrb[0].mxu0
    %v310 = vadd.f32 0.0, %v309
    %v311 = vpop.f32.mrb[0].mxu0
    %v312 = vpop.f32.mrb[0].mxu0
    %v313 = vadd.f32 0.0, %v312
    %v314 = vpop.f32.mrb[0].mxu0
    %315 = vdwg.mxu0
    %v316 = vadd.f32 %v208, %v310
    %v317 = vadd.f32 %v209, %v313
    %318 = vst [vmem:[#allocation2] sm:$0xff] %v316
    %319 = vst [vmem:[#allocation2 + $0x8] sm:$0xff] %v317
    // Predicated region
    $region46: #{tpu_custom_call.1} parent=1 // pred_check
      %p320 = pneg %p69
    $region47: #{tpu_custom_call.1} parent=1 // pred_check_branch
      %322 = sbr.rel (%p320) target = $region49
    $region48: #{tpu_custom_call.1} parent=1 // pred_region
      %v323 = vld [vmem:[#allocation2] sm:$0xff]
      %v324 = vld [vmem:[#allocation2 + $0x8] sm:$0xff]
      %v325 = vld [vmem:[%s4] sm:$0x1]
      %v327 = vlaneseq
      %v328 = vshrl.u32 %v327, 7
      %v329 = vsub.s32 0, %v328
      %v330 = vrot.slane %v325, %v329
      %v332 = vadd.f32 %v323, %v330
      %v333 = vadd.f32 %v324, %v330
      %v334 = vadd.f32 %v75, %v332
      %v335 = vadd.f32 %v76, %v333
      %336 = vadd.xlane.f32.xlu0 %v334
      %v337 = vpop.xlane.xlu0 %336
      %338 = vadd.xlane.f32.xlu0 %v335
      %v339 = vpop.xlane.xlu0 %338
      %v340 = vmul.f32 %v337, 0.03125
      %v341 = vmul.f32 %v339, 0.03125
      %v342 = vsub.f32 %v334, %v340
      %v343 = vsub.f32 %v335, %v341
      %v344 = vlaneseq
      %v345 = vand.u32 %v344, 127
      %vm346 = vcmp.lt.s32.totalorder %v345, 32
      %v347 = vsel %vm346, %v342, 0.0
      %v348 = vsel %vm346, %v343, 0.0
      %v349 = vmul.f32 %v347, %v347
      %v350 = vmul.f32 %v348, %v348
      %351 = vadd.xlane.f32.xlu0 %v349
      %v352 = vpop.xlane.xlu0 %351
      %353 = vadd.xlane.f32.xlu0 %v350
      %v354 = vpop.xlane.xlu0 %353
      %v355 = vrcp.pop 31.0
      %v356 = vmul.f32 %v352, %v355
      %v357 = vmul.f32 %v354, %v355
      %v358 = vrsqrt.pop %v356
      %v359 = vmul.f32 %v356, %v358
      %vm360 = vcmp.eq.f32.partialorder %v356, inf
      %v361 = vsel %vm360, %v356, %v359
      %vm362 = vcmp.eq.f32.partialorder %v356, 0.0
      %v363 = vand.u32 %v356, 2147483648
      %v364 = vsel %vm362, %v363, %v361
      %v365 = vrsqrt.pop %v357
      %v366 = vmul.f32 %v357, %v365
      %vm367 = vcmp.eq.f32.partialorder %v357, inf
      %v368 = vsel %vm367, %v357, %v366
      %vm369 = vcmp.eq.f32.partialorder %v357, 0.0
      %v370 = vand.u32 %v357, 2147483648
      %v371 = vsel %vm369, %v370, %v368
      %v372 = vadd.f32 %v364, 1e-06
      %v373 = vadd.f32 %v371, 1e-06
      %v374 = vrcp.pop %v372
      %v375 = vrcp.pop %v373
      %v376 = vld [vmem:[%s5] sm:$0x1]
      %v378 = vlaneseq
      %v379 = vshrl.u32 %v378, 7
      %v380 = vsub.s32 0, %v379
      %v381 = vrot.slane %v376, %v380
      %v383 = vmul.f32 %v381, %v342
      %v384 = vmul.f32 %v381, %v343
      %v385 = vmul.f32 %v383, %v374
      %v386 = vmul.f32 %v384, %v375
      %v387 = vld [vmem:[%s6] sm:$0x1]
      %v389 = vlaneseq
      %v390 = vshrl.u32 %v389, 7
      %v391 = vsub.s32 0, %v390
      %v392 = vrot.slane %v387, %v391
      %v394 = vadd.f32 %v385, %v392
      %v395 = vadd.f32 %v386, %v392
      %396 = vst [vmem:[#allocation9] sm:$0xff] %v394
      %397 = vst [vmem:[#allocation9 + $0x8] sm:$0xff] %v395
    $region49: #{tpu_custom_call.1} parent=1 // pred_fallthru
      _
    // Predicated region
    $region50: #{tpu_custom_call.1} parent=1 // pred_check
      _
    $region51: #{tpu_custom_call.1} parent=1 // pred_check_branch
      %399 = sbr.rel (0) target = $region53
    $region52: #{tpu_custom_call.1} parent=1 // pred_region
      %s401 = ssub.s32 256, 256
      %402 = vsyncadd [#allocation5], %s401
      %s403 = sshll.u32 [#allocation9], 4
      %s404 = int_to_ptr.vmem [resolvable:$true] %s403
      %409 = dma.vmem_to_hbm [thread:$0]  %s404, 256, %s7, [#allocation5], 128, 128, 8
    $region53: #{tpu_custom_call.1} parent=1 // pred_fallthru
      _
    // Predicated region
    $region54: #{tpu_custom_call.1} parent=1 // pred_check
      _
    $region55: #{tpu_custom_call.1} parent=1 // pred_check_branch
      %411 = sbr.rel (0) target = $region57
    $region56: #{tpu_custom_call.1} parent=1 // pred_region
      %412 = dma.done [#allocation5], 256
    $region57: #{tpu_custom_call.1} parent=1 // pred_fallthru
      _
    %413 = vsyncpa [#allocation4], 1
    %414 = vsyncpa [#allocation7], 1
    %415 = vsyncpa [#allocation5], 1

</llo_original>
